<compile_context>
chip_gen: v7x
topology: tpu7x:2x2x1
jax: 0.10.0
libtpu: 0.0.40
codegen_flags: <defaults>
</compile_context>

<pallas_src>
import jax
import jax.numpy as jnp
from jax.experimental import pallas as pl
from jax.experimental.pallas import tpu as pltpu

D_IN = 768        # D_in in the PyTorch __init__
BERT_OUT = 100    # Bert_out in the PyTorch __init__
N_PAD = 128       # lane-dense padded output width
TILE_M_CAP = 1024 # f32 tile 3 MiB, double-buffered + out + weights ~7.5 MiB: fits all gens


def _round_up(x, m):
    return (x + m - 1) // m * m


def _bert_head_kernel(pooled_ref, w_ref, b_ref, out_ref):
    # f32 activation tile cast to bf16 in VMEM (no separate HBM cast pass),
    # bf16 @ bf16 on the MXU with f32 accumulation, then f32 bias add.
    a = pooled_ref[...].astype(jnp.bfloat16)
    acc = jnp.dot(a, w_ref[...], preferred_element_type=jnp.float32)
    out_ref[...] = (acc + b_ref[...]).astype(out_ref.dtype)


def prepare_bert_head_params(w, b):
    """Pad Linear(D_IN -> BERT_OUT) params to lane-dense shapes.

    Returns (w_pad: (D_IN, 128) bf16, b_pad: (1, 128) f32). Padded columns are zero and
    are sliced off after the kernel. Call once per weight update (hoisted out of the
    per-forward path)."""
    w_pad = jnp.zeros((D_IN, N_PAD), dtype=jnp.bfloat16).at[:, :BERT_OUT].set(
        w.astype(jnp.bfloat16))
    b_pad = jnp.zeros((1, N_PAD), dtype=jnp.float32).at[:, :BERT_OUT].set(
        b.astype(jnp.float32).reshape(1, BERT_OUT))
    return w_pad, b_pad


def bert_head_pallas(pooled, w_pad, b_pad):
    """pooled: (B, D_IN) f32, w_pad: (D_IN, 128) bf16, b_pad: (1, 128) f32.
    Returns (B, BERT_OUT) f32."""
    B = pooled.shape[0]

    # Pad the batch only to a multiple of 16 (full bf16 sublane packing); do NOT pad to a
    # multiple of tile_m -- the last grid block may be partial (Pallas masks the
    # out-of-bounds rows, and they are sliced off below).
    b_rows = _round_up(B, 16)
    if b_rows != B:
        pooled = jnp.pad(pooled, ((0, b_rows - B), (0, 0)))

    # Give the parallel M axis >= 2 programs whenever the batch allows it so both v7x
    # TensorCores (and their HBM bandwidth) get work; cap the tile for VMEM.
    if b_rows <= 16:
        tile_m = b_rows
    else:
        tile_m = min(TILE_M_CAP, _round_up(pl.cdiv(b_rows, 2), 16))
    grid_m = pl.cdiv(b_rows, tile_m)

    cost = pl.CostEstimate(
        flops=2 * b_rows * D_IN * N_PAD,
        transcendentals=0,
        bytes_accessed=(b_rows * D_IN * 4        # pooled (f32 in HBM)
                        + D_IN * N_PAD * 2       # weight (bf16)
                        + N_PAD * 4              # bias
                        + b_rows * N_PAD * 4),   # output (f32)
    )

    out = pl.pallas_call(
        _bert_head_kernel,
        out_shape=jax.ShapeDtypeStruct((b_rows, N_PAD), jnp.float32),
        grid=(grid_m,),
        in_specs=[
            pl.BlockSpec((tile_m, D_IN), lambda i: (i, 0)),   # activations, streamed over M
            pl.BlockSpec((D_IN, N_PAD), lambda i: (0, 0)),    # weight, VMEM-resident
            pl.BlockSpec((1, N_PAD), lambda i: (0, 0)),       # bias,   VMEM-resident
        ],
        out_specs=pl.BlockSpec((tile_m, N_PAD), lambda i: (i, 0)),
        compiler_params=pltpu.CompilerParams(
            dimension_semantics=("parallel",)),
        cost_estimate=cost,
    )(pooled, w_pad, b_pad)

    return out[:B, :BERT_OUT]


@jax.jit
def regression_model_adapters_forward(outputs, w_pad, b_pad):
    """outputs = (sequence_output (B,S,D_IN), pooled_output (B,D_IN))."""
    sequence_output, pooled_output = outputs

    # cls_output = outputs[0][:, 0] is computed in the original forward but unused in the
    # returned value; under jit it is dead code and removed by DCE.
    cls_output = sequence_output[:, 0]
    del cls_output
    # TODO(synk): `logits = super().forward(cls_output)` calls nn.Module.forward, which has no
    # defined computation (raises in PyTorch); there is no Pallas equivalent, so it is skipped.

    bert_output = pooled_output                         # outputs[1]
    after_bert_outputs = bert_head_pallas(bert_output, w_pad, b_pad)
    return after_bert_outputs


if __name__ == "__main__":
    key = jax.random.PRNGKey(0)
    k_seq, k_pool, k_w, k_b = jax.random.split(key, 4)

    B, S = 2, 8
    # Synthetic "BERT outputs" tuple (sequence_output, pooled_output).
    sequence_output = jax.random.normal(k_seq, (B, S, D_IN), dtype=jnp.float32)
    pooled_output = jax.random.normal(k_pool, (B, D_IN), dtype=jnp.float32)

    # Deterministic bert_head parameters: Linear(D_in=768, Bert_out=100).
    w_head = jax.random.normal(k_w, (D_IN, BERT_OUT), dtype=jnp.float32) * (1.0 / jnp.sqrt(D_IN))
    b_head = jax.random.normal(k_b, (BERT_OUT,), dtype=jnp.float32) * 0.01

    # Parameter padding hoisted out of the forward path (done once per weight update).
    w_pad, b_pad = prepare_bert_head_params(w_head, b_head)

    out = regression_model_adapters_forward((sequence_output, pooled_output), w_pad, b_pad)
    out = jax.block_until_ready(out)

    # Reference checks in plain JAX.
    ref_bf16 = jnp.dot(pooled_output.astype(jnp.bfloat16),
                       w_head.astype(jnp.bfloat16),
                       preferred_element_type=jnp.float32) + b_head
    ref_f32 = pooled_output @ w_head + b_head

    assert out.shape == (B, BERT_OUT), out.shape
    assert jnp.allclose(out, ref_bf16, atol=2e-2, rtol=2e-2), "mismatch vs bf16-input reference"
    assert jnp.allclose(out, ref_f32, atol=1e-1, rtol=1e-1), "mismatch vs f32 reference"

    print("KERNEL_OK")
</pallas_src>

<mosaic_0001>
module attributes {stable_mosaic.version = 11 : i64} {
  func.func @_bert_head_kernel(%arg0: i32, %arg1: memref<16x768xf32, #tpu.memory_space<vmem>>, %arg2: memref<768x128xbf16, #tpu.memory_space<vmem>>, %arg3: memref<1x128xf32, #tpu.memory_space<vmem>>, %arg4: memref<16x128xf32, #tpu.memory_space<vmem>>) attributes {dimension_semantics = [#tpu.dimension_semantics<parallel>], iteration_bounds = array<i64: 1>, scalar_prefetch = 0 : i64, scratch_operands = 0 : i64, tpu.core_type = #tpu.core_type<tc>, window_params = [{transform_indices = @transform_0, window_bounds = array<i64: 16, 768>}, {pipeline_mode = #tpu.pipeline_mode<synchronous>, transform_indices = @transform_1, window_bounds = array<i64: 768, 128>}, {pipeline_mode = #tpu.pipeline_mode<synchronous>, transform_indices = @transform_2, window_bounds = array<i64: 1, 128>}, {transform_indices = @transform_3, window_bounds = array<i64: 16, 128>}]} {
    %c0 = arith.constant 0 : index
    %c0_0 = arith.constant 0 : index
    %0 = vector.load %arg1[%c0, %c0_0] : memref<16x768xf32, #tpu.memory_space<vmem>>, vector<16x768xf32>
    %1 = arith.truncf %0 : vector<16x768xf32> to vector<16x768xbf16>
    %c0_1 = arith.constant 0 : index
    %c0_2 = arith.constant 0 : index
    %2 = vector.load %arg2[%c0_1, %c0_2] : memref<768x128xbf16, #tpu.memory_space<vmem>>, vector<768x128xbf16>
    %cst = arith.constant dense<0.000000e+00> : vector<16x128xf32>
    %3 = tpu.matmul %1, %2, %cst {dimension_numbers = #tpu.dot_dimension_numbers<[1], [0], [0], [1], [0, 0, 1, 1], [], []>} : vector<16x768xbf16>, vector<768x128xbf16>, vector<16x128xf32> -> vector<16x128xf32>
    %c0_3 = arith.constant 0 : index
    %c0_4 = arith.constant 0 : index
    %4 = vector.load %arg3[%c0_3, %c0_4] : memref<1x128xf32, #tpu.memory_space<vmem>>, vector<1x128xf32>
    %5 = vector.broadcast %4 : vector<1x128xf32> to vector<16x128xf32>
    %6 = arith.addf %3, %5 : vector<16x128xf32>
    %c0_5 = arith.constant 0 : index
    %c0_6 = arith.constant 0 : index
    %7 = vector.load %arg4[%c0_5, %c0_6] : memref<16x128xf32, #tpu.memory_space<vmem>>, vector<16x128xf32>
    tpu.vector_store %arg4[%c0_5, %c0_6], %6 {strides = array<i32>} : memref<16x128xf32, #tpu.memory_space<vmem>>, vector<16x128xf32>,
    return
  }
  func.func @transform_0(%arg0: i32) -> (i32, i32) {
    %c0_i32 = arith.constant 0 : i32
    %c0_i32_0 = arith.constant 0 : i32
    return %arg0, %c0_i32 : i32, i32
  }
  func.func @transform_1(%arg0: i32) -> (i32, i32) {
    %c0_i32 = arith.constant 0 : i32
    %c0_i32_0 = arith.constant 0 : i32
    %c0_i32_1 = arith.constant 0 : i32
    return %c0_i32, %c0_i32_0 : i32, i32
  }
  func.func @transform_2(%arg0: i32) -> (i32, i32) {
    %c0_i32 = arith.constant 0 : i32
    %c0_i32_0 = arith.constant 0 : i32
    %c0_i32_1 = arith.constant 0 : i32
    return %c0_i32, %c0_i32_0 : i32, i32
  }
  func.func @transform_3(%arg0: i32) -> (i32, i32) {
    %c0_i32 = arith.constant 0 : i32
    %c0_i32_0 = arith.constant 0 : i32
    return %arg0, %c0_i32 : i32, i32
  }
}

</mosaic_0001>

<llo_original>
// kernel: regression_model_adapters_forward.1
$region0: #{regression_model_adapters_forward.1}
  #allocation0 [shape = 'u32[]', space=smem, size = 0x4, offset = 0x4, fixed_abs, tag = 'smem constant byte address 0x4 - core index']
  #allocation1 [shape = 'u32[144,128]{1,0:T(1,128)}', space=vmem, size = 0x12000, scoped, tag = 'internal scratch']
  %s0 = inlined_call_operand.vmem [shape: f32[16,768], index: 0, kind: input, shape index: {}]
  %s1 = inlined_call_operand.hbm [shape: bf16[768,128], index: 1, kind: input, shape index: {}]
  %s2 = inlined_call_operand.vmem [shape: f32[1,128], index: 2, kind: input, shape index: {}]
  %s3 = inlined_call_operand.vmem [shape: f32[16,128], index: 3, kind: output, shape index: {}]
  %s4 = sld [smem:[#allocation0]]
  $region26: #{regression_model_adapters_forward.1} parent=0
    _
  %s6 = ssub.s32 1, %s4
  %s7 = scalar_select 0, %s6, %s4
  $region1: #{regression_model_adapters_forward.1} parent=0
    #allocation2 [shape = 'u8[196608]{0}', space=vmem, size = 0x30000, scoped, tag = 'input window, operand 1, single buffered']
    #allocation3 [shape = 's32[1]{0}', space=sflag, size = 0x4, scoped, tag = 'scoped memory for regression_model_adapters_forward.1']
    %8 = vsyncpa [#allocation3], 0
    // Predicated region
    $region2: #{regression_model_adapters_forward.1} parent=1 // pred_check
      _
    $region3: #{regression_model_adapters_forward.1} parent=1 // pred_check_branch
      %10 = sbr.rel (0) target = $region5
    $region4: #{regression_model_adapters_forward.1} parent=1 // pred_region
      _
    $region5: #{regression_model_adapters_forward.1} parent=1 // pred_fallthru
      _
    // Predicated region
    $region6: #{regression_model_adapters_forward.1} parent=1 // pred_check
      _
    $region7: #{regression_model_adapters_forward.1} parent=1 // pred_check_branch
      %12 = sbr.rel (0) target = $region9
    $region8: #{regression_model_adapters_forward.1} parent=1 // pred_region
      %s14 = ssub.s32 6144, 6144
      %15 = vsyncadd [#allocation3], %s14
      %s16 = sshll.u32 [#allocation2], 4
      %s17 = int_to_ptr.vmem [resolvable:$true] %s16
      %22 = dma.hbm_to_vmem [thread:$0]  %s1, 6144, %s17, [#allocation3], 64, 64, 4
    $region9: #{regression_model_adapters_forward.1} parent=1 // pred_fallthru
      _
    // Predicated region
    $region10: #{regression_model_adapters_forward.1} parent=1 // pred_check
      _
    $region11: #{regression_model_adapters_forward.1} parent=1 // pred_check_branch
      %24 = sbr.rel (0) target = $region13
    $region12: #{regression_model_adapters_forward.1} parent=1 // pred_region
      _
    $region13: #{regression_model_adapters_forward.1} parent=1 // pred_fallthru
      _
    // Predicated region
    $region14: #{regression_model_adapters_forward.1} parent=1 // pred_check
      _
    $region15: #{regression_model_adapters_forward.1} parent=1 // pred_check_branch
      %26 = sbr.rel (0) target = $region17
    $region16: #{regression_model_adapters_forward.1} parent=1 // pred_region
      %27 = dma.done [#allocation3], 6144
    $region17: #{regression_model_adapters_forward.1} parent=1 // pred_fallthru
      _
    %v29 = vld [vmem:[%s0] sm:$0xff]
    %v30 = vld [vmem:[%s0 + $0x8] sm:$0xff]
    %v31 = vld [vmem:[%s0 + $0x10] sm:$0xff]
    %v32 = vld [vmem:[%s0 + $0x18] sm:$0xff]
    %v33 = vld [vmem:[%s0 + $0x20] sm:$0xff]
    %v34 = vld [vmem:[%s0 + $0x28] sm:$0xff]
    %v35 = vld [vmem:[%s0 + $0x30] sm:$0xff]
    %v36 = vld [vmem:[%s0 + $0x38] sm:$0xff]
    %v37 = vld [vmem:[%s0 + $0x40] sm:$0xff]
    %v38 = vld [vmem:[%s0 + $0x48] sm:$0xff]
    %v39 = vld [vmem:[%s0 + $0x50] sm:$0xff]
    %v40 = vld [vmem:[%s0 + $0x58] sm:$0xff]
    %v41 = vpack.c.bf16 %v35, %v29
    %v42 = vpack.c.bf16 %v36, %v30
    %v43 = vpack.c.bf16 %v37, %v31
    %v44 = vpack.c.bf16 %v38, %v32
    %v45 = vpack.c.bf16 %v39, %v33
    %v46 = vpack.c.bf16 %v40, %v34
    %v47 = vld [vmem:[#allocation2] sm:$0xf]
    %v48 = vld [vmem:[#allocation2 + $0x4] sm:$0xf]
    %v49 = vld [vmem:[#allocation2 + $0x8] sm:$0xf]
    %v50 = vld [vmem:[#allocation2 + $0xc] sm:$0xf]
    %v51 = vld [vmem:[#allocation2 + $0x10] sm:$0xf]
    %v52 = vld [vmem:[#allocation2 + $0x14] sm:$0xf]
    %v53 = vld [vmem:[#allocation2 + $0x18] sm:$0xf]
    %v54 = vld [vmem:[#allocation2 + $0x1c] sm:$0xf]
    %v55 = vld [vmem:[#allocation2 + $0x20] sm:$0xf]
    %v56 = vld [vmem:[#allocation2 + $0x24] sm:$0xf]
    %v57 = vld [vmem:[#allocation2 + $0x28] sm:$0xf]
    %v58 = vld [vmem:[#allocation2 + $0x2c] sm:$0xf]
    %v59 = vld [vmem:[#allocation2 + $0x30] sm:$0xf]
    %v60 = vld [vmem:[#allocation2 + $0x34] sm:$0xf]
    %v61 = vld [vmem:[#allocation2 + $0x38] sm:$0xf]
    %v62 = vld [vmem:[#allocation2 + $0x3c] sm:$0xf]
    %v63 = vld [vmem:[#allocation2 + $0x40] sm:$0xf]
    %v64 = vld [vmem:[#allocation2 + $0x44] sm:$0xf]
    %v65 = vld [vmem:[#allocation2 + $0x48] sm:$0xf]
    %v66 = vld [vmem:[#allocation2 + $0x4c] sm:$0xf]
    %v67 = vld [vmem:[#allocation2 + $0x50] sm:$0xf]
    %v68 = vld [vmem:[#allocation2 + $0x54] sm:$0xf]
    %v69 = vld [vmem:[#allocation2 + $0x58] sm:$0xf]
    %v70 = vld [vmem:[#allocation2 + $0x5c] sm:$0xf]
    %v71 = vld [vmem:[#allocation2 + $0x60] sm:$0xf]
    %v72 = vld [vmem:[#allocation2 + $0x64] sm:$0xf]
    %v73 = vld [vmem:[#allocation2 + $0x68] sm:$0xf]
    %v74 = vld [vmem:[#allocation2 + $0x6c] sm:$0xf]
    %v75 = vld [vmem:[#allocation2 + $0x70] sm:$0xf]
    %v76 = vld [vmem:[#allocation2 + $0x74] sm:$0xf]
    %v77 = vld [vmem:[#allocation2 + $0x78] sm:$0xf]
    %v78 = vld [vmem:[#allocation2 + $0x7c] sm:$0xf]
    %v79 = vld [vmem:[#allocation2 + $0x80] sm:$0xf]
    %v80 = vld [vmem:[#allocation2 + $0x84] sm:$0xf]
    %v81 = vld [vmem:[#allocation2 + $0x88] sm:$0xf]
    %v82 = vld [vmem:[#allocation2 + $0x8c] sm:$0xf]
    %v83 = vld [vmem:[#allocation2 + $0x90] sm:$0xf]
    %v84 = vld [vmem:[#allocation2 + $0x94] sm:$0xf]
    %v85 = vld [vmem:[#allocation2 + $0x98] sm:$0xf]
    %v86 = vld [vmem:[#allocation2 + $0x9c] sm:$0xf]
    %v87 = vld [vmem:[#allocation2 + $0xa0] sm:$0xf]
    %v88 = vld [vmem:[#allocation2 + $0xa4] sm:$0xf]
    %v89 = vld [vmem:[#allocation2 + $0xa8] sm:$0xf]
    %v90 = vld [vmem:[#allocation2 + $0xac] sm:$0xf]
    %v91 = vld [vmem:[#allocation2 + $0xb0] sm:$0xf]
    %v92 = vld [vmem:[#allocation2 + $0xb4] sm:$0xf]
    %v93 = vld [vmem:[#allocation2 + $0xb8] sm:$0xf]
    %v94 = vld [vmem:[#allocation2 + $0xbc] sm:$0xf]
    %v95 = vld [vmem:[#allocation2 + $0xc0] sm:$0xf]
    %v96 = vld [vmem:[#allocation2 + $0xc4] sm:$0xf]
    %v97 = vld [vmem:[#allocation2 + $0xc8] sm:$0xf]
    %v98 = vld [vmem:[#allocation2 + $0xcc] sm:$0xf]
    %v99 = vld [vmem:[#allocation2 + $0xd0] sm:$0xf]
    %v100 = vld [vmem:[#allocation2 + $0xd4] sm:$0xf]
    %v101 = vld [vmem:[#allocation2 + $0xd8] sm:$0xf]
    %v102 = vld [vmem:[#allocation2 + $0xdc] sm:$0xf]
    %v103 = vld [vmem:[#allocation2 + $0xe0] sm:$0xf]
    %v104 = vld [vmem:[#allocation2 + $0xe4] sm:$0xf]
    %v105 = vld [vmem:[#allocation2 + $0xe8] sm:$0xf]
    %v106 = vld [vmem:[#allocation2 + $0xec] sm:$0xf]
    %v107 = vld [vmem:[#allocation2 + $0xf0] sm:$0xf]
    %v108 = vld [vmem:[#allocation2 + $0xf4] sm:$0xf]
    %v109 = vld [vmem:[#allocation2 + $0xf8] sm:$0xf]
    %v110 = vld [vmem:[#allocation2 + $0xfc] sm:$0xf]
    %v111 = vld [vmem:[#allocation2 + $0x100] sm:$0xf]
    %v112 = vld [vmem:[#allocation2 + $0x104] sm:$0xf]
    %v113 = vld [vmem:[#allocation2 + $0x108] sm:$0xf]
    %v114 = vld [vmem:[#allocation2 + $0x10c] sm:$0xf]
    %v115 = vld [vmem:[#allocation2 + $0x110] sm:$0xf]
    %v116 = vld [vmem:[#allocation2 + $0x114] sm:$0xf]
    %v117 = vld [vmem:[#allocation2 + $0x118] sm:$0xf]
    %v118 = vld [vmem:[#allocation2 + $0x11c] sm:$0xf]
    %v119 = vld [vmem:[#allocation2 + $0x120] sm:$0xf]
    %v120 = vld [vmem:[#allocation2 + $0x124] sm:$0xf]
    %v121 = vld [vmem:[#allocation2 + $0x128] sm:$0xf]
    %v122 = vld [vmem:[#allocation2 + $0x12c] sm:$0xf]
    %v123 = vld [vmem:[#allocation2 + $0x130] sm:$0xf]
    %v124 = vld [vmem:[#allocation2 + $0x134] sm:$0xf]
    %v125 = vld [vmem:[#allocation2 + $0x138] sm:$0xf]
    %v126 = vld [vmem:[#allocation2 + $0x13c] sm:$0xf]
    %v127 = vld [vmem:[#allocation2 + $0x140] sm:$0xf]
    %v128 = vld [vmem:[#allocation2 + $0x144] sm:$0xf]
    %v129 = vld [vmem:[#allocation2 + $0x148] sm:$0xf]
    %v130 = vld [vmem:[#allocation2 + $0x14c] sm:$0xf]
    %v131 = vld [vmem:[#allocation2 + $0x150] sm:$0xf]
    %v132 = vld [vmem:[#allocation2 + $0x154] sm:$0xf]
    %v133 = vld [vmem:[#allocation2 + $0x158] sm:$0xf]
    %v134 = vld [vmem:[#allocation2 + $0x15c] sm:$0xf]
    %v135 = vld [vmem:[#allocation2 + $0x160] sm:$0xf]
    %v136 = vld [vmem:[#allocation2 + $0x164] sm:$0xf]
    %v137 = vld [vmem:[#allocation2 + $0x168] sm:$0xf]
    %v138 = vld [vmem:[#allocation2 + $0x16c] sm:$0xf]
    %v139 = vld [vmem:[#allocation2 + $0x170] sm:$0xf]
    %v140 = vld [vmem:[#allocation2 + $0x174] sm:$0xf]
    %v141 = vld [vmem:[#allocation2 + $0x178] sm:$0xf]
    %v142 = vld [vmem:[#allocation2 + $0x17c] sm:$0xf]
    %v143 = vld [vmem:[%s2] sm:$0x1]
    %v145 = vlaneseq
    %v146 = vshrl.u32 %v145, 7
    %v147 = vsub.s32 0, %v146
    %v148 = vrot.slane %v143, %v147
    %v246 = vunpack.c.l.b16 %v47
    %v247 = vunpack.c.l.b16 %v48
    %v248 = vunpack.c.l.b16 %v49
    %v249 = vunpack.c.l.b16 %v50
    %v250 = vunpack.c.l.b16 %v51
    %v251 = vunpack.c.l.b16 %v52
    %v252 = vunpack.c.l.b16 %v53
    %v253 = vunpack.c.l.b16 %v54
    %v254 = vunpack.c.l.b16 %v55
    %v255 = vunpack.c.l.b16 %v56
    %v256 = vunpack.c.l.b16 %v57
    %v257 = vunpack.c.l.b16 %v58
    %v258 = vunpack.c.l.b16 %v59
    %v259 = vunpack.c.l.b16 %v60
    %v260 = vunpack.c.l.b16 %v61
    %v261 = vunpack.c.l.b16 %v62
    %v262 = vunpack.c.l.b16 %v63
    %v263 = vunpack.c.l.b16 %v64
    %v264 = vunpack.c.l.b16 %v65
    %v265 = vunpack.c.l.b16 %v66
    %v266 = vunpack.c.l.b16 %v67
    %v267 = vunpack.c.l.b16 %v68
    %v268 = vunpack.c.l.b16 %v69
    %v269 = vunpack.c.l.b16 %v70
    %v270 = vunpack.c.l.b16 %v71
    %v271 = vunpack.c.l.b16 %v72
    %v272 = vunpack.c.l.b16 %v73
    %v273 = vunpack.c.l.b16 %v74
    %v274 = vunpack.c.l.b16 %v75
    %v275 = vunpack.c.l.b16 %v76
    %v276 = vunpack.c.l.b16 %v77
    %v277 = vunpack.c.l.b16 %v78
    %v278 = vunpack.c.l.b16 %v79
    %v279 = vunpack.c.l.b16 %v80
    %v280 = vunpack.c.l.b16 %v81
    %v281 = vunpack.c.l.b16 %v82
    %v282 = vunpack.c.l.b16 %v83
    %v283 = vunpack.c.l.b16 %v84
    %v284 = vunpack.c.l.b16 %v85
    %v285 = vunpack.c.l.b16 %v86
    %v286 = vunpack.c.l.b16 %v87
    %v287 = vunpack.c.l.b16 %v88
    %v288 = vunpack.c.l.b16 %v89
    %v289 = vunpack.c.l.b16 %v90
    %v290 = vunpack.c.l.b16 %v91
    %v291 = vunpack.c.l.b16 %v92
    %v292 = vunpack.c.l.b16 %v93
    %v293 = vunpack.c.l.b16 %v94
    %v294 = vunpack.c.l.b16 %v95
    %v295 = vunpack.c.l.b16 %v96
    %v296 = vunpack.c.l.b16 %v97
    %v297 = vunpack.c.l.b16 %v98
    %v298 = vunpack.c.l.b16 %v99
    %v299 = vunpack.c.l.b16 %v100
    %v300 = vunpack.c.l.b16 %v101
    %v301 = vunpack.c.l.b16 %v102
    %v302 = vunpack.c.l.b16 %v103
    %v303 = vunpack.c.l.b16 %v104
    %v304 = vunpack.c.l.b16 %v105
    %v305 = vunpack.c.l.b16 %v106
    %v306 = vunpack.c.l.b16 %v107
    %v307 = vunpack.c.l.b16 %v108
    %v308 = vunpack.c.l.b16 %v109
    %v309 = vunpack.c.l.b16 %v110
    %v310 = vunpack.c.l.b16 %v111
    %v311 = vunpack.c.l.b16 %v112
    %v312 = vunpack.c.l.b16 %v113
    %v313 = vunpack.c.l.b16 %v114
    %v314 = vunpack.c.l.b16 %v115
    %v315 = vunpack.c.l.b16 %v116
    %v316 = vunpack.c.l.b16 %v117
    %v317 = vunpack.c.l.b16 %v118
    %v318 = vunpack.c.l.b16 %v119
    %v319 = vunpack.c.l.b16 %v120
    %v320 = vunpack.c.l.b16 %v121
    %v321 = vunpack.c.l.b16 %v122
    %v322 = vunpack.c.l.b16 %v123
    %v323 = vunpack.c.l.b16 %v124
    %v324 = vunpack.c.l.b16 %v125
    %v325 = vunpack.c.l.b16 %v126
    %v326 = vunpack.c.l.b16 %v127
    %v327 = vunpack.c.l.b16 %v128
    %v328 = vunpack.c.l.b16 %v129
    %v329 = vunpack.c.l.b16 %v130
    %v330 = vunpack.c.l.b16 %v131
    %v331 = vunpack.c.l.b16 %v132
    %v332 = vunpack.c.l.b16 %v133
    %v333 = vunpack.c.l.b16 %v134
    %v334 = vunpack.c.l.b16 %v135
    %v335 = vunpack.c.l.b16 %v136
    %v336 = vunpack.c.l.b16 %v137
    %v337 = vunpack.c.l.b16 %v138
    %v338 = vunpack.c.l.b16 %v139
    %v339 = vunpack.c.l.b16 %v140
    %v340 = vunpack.c.l.b16 %v141
    %v341 = vunpack.c.l.b16 %v142
    %v342 = vpack.c.b16 %v247, %v246
    %v343 = vpack.c.b16 %v249, %v248
    %v344 = vpack.c.b16 %v251, %v250
    %v345 = vpack.c.b16 %v253, %v252
    %v346 = vpack.c.b16 %v255, %v254
    %v347 = vpack.c.b16 %v257, %v256
    %v348 = vpack.c.b16 %v259, %v258
    %v349 = vpack.c.b16 %v261, %v260
    %v350 = vpack.c.b16 %v263, %v262
    %v351 = vpack.c.b16 %v265, %v264
    %v352 = vpack.c.b16 %v267, %v266
    %v353 = vpack.c.b16 %v269, %v268
    %v354 = vpack.c.b16 %v271, %v270
    %v355 = vpack.c.b16 %v273, %v272
    %v356 = vpack.c.b16 %v275, %v274
    %v357 = vpack.c.b16 %v277, %v276
    %v358 = vpack.c.b16 %v279, %v278
    %v359 = vpack.c.b16 %v281, %v280
    %v360 = vpack.c.b16 %v283, %v282
    %v361 = vpack.c.b16 %v285, %v284
    %v362 = vpack.c.b16 %v287, %v286
    %v363 = vpack.c.b16 %v289, %v288
    %v364 = vpack.c.b16 %v291, %v290
    %v365 = vpack.c.b16 %v293, %v292
    %v366 = vpack.c.b16 %v295, %v294
    %v367 = vpack.c.b16 %v297, %v296
    %v368 = vpack.c.b16 %v299, %v298
    %v369 = vpack.c.b16 %v301, %v300
    %v370 = vpack.c.b16 %v303, %v302
    %v371 = vpack.c.b16 %v305, %v304
    %v372 = vpack.c.b16 %v307, %v306
    %v373 = vpack.c.b16 %v309, %v308
    %v374 = vpack.c.b16 %v311, %v310
    %v375 = vpack.c.b16 %v313, %v312
    %v376 = vpack.c.b16 %v315, %v314
    %v377 = vpack.c.b16 %v317, %v316
    %v378 = vpack.c.b16 %v319, %v318
    %v379 = vpack.c.b16 %v321, %v320
    %v380 = vpack.c.b16 %v323, %v322
    %v381 = vpack.c.b16 %v325, %v324
    %v382 = vpack.c.b16 %v327, %v326
    %v383 = vpack.c.b16 %v329, %v328
    %v384 = vpack.c.b16 %v331, %v330
    %v385 = vpack.c.b16 %v333, %v332
    %v386 = vpack.c.b16 %v335, %v334
    %v387 = vpack.c.b16 %v337, %v336
    %v388 = vpack.c.b16 %v339, %v338
    %v389 = vpack.c.b16 %v341, %v340
    %438 = vmatprep.subr.bf16.mxu0 0
    %439 = vmatpush1.bf16.msra.mxu0 %v342
    %440 = vmatprep.subr.bf16.mxu0 0
    %441 = vmatpush1.bf16.msra.mxu0 %v343
    %442 = vmatprep.subr.bf16.mxu0 0
    %443 = vmatpush1.bf16.msra.mxu0 %v344
    %444 = vmatprep.subr.bf16.mxu0 0
    %445 = vmatpush1.bf16.msra.mxu0 %v345
    %446 = vmatprep.subr.bf16.mxu0 0
    %447 = vmatpush1.bf16.msra.mxu0 %v346
    %448 = vmatprep.subr.bf16.mxu0 0
    %449 = vmatpush1.bf16.msra.mxu0 %v347
    %450 = vmatprep.subr.bf16.mxu0 0
    %451 = vmatpush1.bf16.msra.mxu0 %v348
    %452 = vmatprep.subr.bf16.mxu0 0
    %453 = vmatpush1.bf16.msra.mxu0 %v349
    %454 = vmatprep.subr.bf16.mxu0 0
    %455 = vmatpush1.bf16.msra.mxu0 %v350
    %456 = vmatprep.subr.bf16.mxu0 0
    %457 = vmatpush1.bf16.msra.mxu0 %v351
    %458 = vmatprep.subr.bf16.mxu0 0
    %459 = vmatpush1.bf16.msra.mxu0 %v352
    %460 = vmatprep.subr.bf16.mxu0 0
    %461 = vmatpush1.bf16.msra.mxu0 %v353
    %462 = vmatprep.subr.bf16.mxu0 0
    %463 = vmatpush1.bf16.msra.mxu0 %v354
    %464 = vmatprep.subr.bf16.mxu0 0
    %465 = vmatpush1.bf16.msra.mxu0 %v355
    %466 = vmatprep.subr.bf16.mxu0 0
    %467 = vmatpush1.bf16.msra.mxu0 %v356
    %468 = vmatprep.subr.bf16.mxu0 0
    %469 = vmatpush1.bf16.msra.mxu0 %v357
    %470 = vmatprep.mubr.bf16.mxu0 %v42
    %471 = vmatmul.mubr.bf16.gmra.mrb[0].mxu0 %v41
    %v472 = vpop.f32.mrb[0].mxu0
    %v473 = vadd.f32 %v148, %v472
    %v474 = vpop.f32.mrb[0].mxu0
    %v475 = vpop.f32.mrb[0].mxu0
    %v476 = vadd.f32 %v148, %v475
    %v477 = vpop.f32.mrb[0].mxu0
    %478 = vdwg.mxu0
    %479 = vmatprep.subr.bf16.mxu0 0
    %480 = vmatpush1.bf16.msra.mxu0 %v358
    %481 = vmatprep.subr.bf16.mxu0 0
    %482 = vmatpush1.bf16.msra.mxu0 %v359
    %483 = vmatprep.subr.bf16.mxu0 0
    %484 = vmatpush1.bf16.msra.mxu0 %v360
    %485 = vmatprep.subr.bf16.mxu0 0
    %486 = vmatpush1.bf16.msra.mxu0 %v361
    %487 = vmatprep.subr.bf16.mxu0 0
    %488 = vmatpush1.bf16.msra.mxu0 %v362
    %489 = vmatprep.subr.bf16.mxu0 0
    %490 = vmatpush1.bf16.msra.mxu0 %v363
    %491 = vmatprep.subr.bf16.mxu0 0
    %492 = vmatpush1.bf16.msra.mxu0 %v364
    %493 = vmatprep.subr.bf16.mxu0 0
    %494 = vmatpush1.bf16.msra.mxu0 %v365
    %495 = vmatprep.subr.bf16.mxu0 0
    %496 = vmatpush1.bf16.msra.mxu0 %v366
    %497 = vmatprep.subr.bf16.mxu0 0
    %498 = vmatpush1.bf16.msra.mxu0 %v367
    %499 = vmatprep.subr.bf16.mxu0 0
    %500 = vmatpush1.bf16.msra.mxu0 %v368
    %501 = vmatprep.subr.bf16.mxu0 0
    %502 = vmatpush1.bf16.msra.mxu0 %v369
    %503 = vmatprep.subr.bf16.mxu0 0
    %504 = vmatpush1.bf16.msra.mxu0 %v370
    %505 = vmatprep.subr.bf16.mxu0 0
    %506 = vmatpush1.bf16.msra.mxu0 %v371
    %507 = vmatprep.subr.bf16.mxu0 0
    %508 = vmatpush1.bf16.msra.mxu0 %v372
    %509 = vmatprep.subr.bf16.mxu0 0
    %510 = vmatpush1.bf16.msra.mxu0 %v373
    %511 = vmatprep.mubr.bf16.mxu0 %v44
    %512 = vmatmul.mubr.bf16.gmra.mrb[0].mxu0 %v43
    %v513 = vpop.f32.mrb[0].mxu0
    %v514 = vadd.f32 %v473, %v513
    %v515 = vpop.f32.mrb[0].mxu0
    %v516 = vpop.f32.mrb[0].mxu0
    %v517 = vadd.f32 %v476, %v516
    %v518 = vpop.f32.mrb[0].mxu0
    %519 = vdwg.mxu0
    %520 = vmatprep.subr.bf16.mxu0 0
    %521 = vmatpush1.bf16.msra.mxu0 %v374
    %522 = vmatprep.subr.bf16.mxu0 0
    %523 = vmatpush1.bf16.msra.mxu0 %v375
    %524 = vmatprep.subr.bf16.mxu0 0
    %525 = vmatpush1.bf16.msra.mxu0 %v376
    %526 = vmatprep.subr.bf16.mxu0 0
    %527 = vmatpush1.bf16.msra.mxu0 %v377
    %528 = vmatprep.subr.bf16.mxu0 0
    %529 = vmatpush1.bf16.msra.mxu0 %v378
    %530 = vmatprep.subr.bf16.mxu0 0
    %531 = vmatpush1.bf16.msra.mxu0 %v379
    %532 = vmatprep.subr.bf16.mxu0 0
    %533 = vmatpush1.bf16.msra.mxu0 %v380
    %534 = vmatprep.subr.bf16.mxu0 0
    %535 = vmatpush1.bf16.msra.mxu0 %v381
    %536 = vmatprep.subr.bf16.mxu0 0
    %537 = vmatpush1.bf16.msra.mxu0 %v382
    %538 = vmatprep.subr.bf16.mxu0 0
    %539 = vmatpush1.bf16.msra.mxu0 %v383
    %540 = vmatprep.subr.bf16.mxu0 0
    %541 = vmatpush1.bf16.msra.mxu0 %v384
    %542 = vmatprep.subr.bf16.mxu0 0
    %543 = vmatpush1.bf16.msra.mxu0 %v385
    %544 = vmatprep.subr.bf16.mxu0 0
    %545 = vmatpush1.bf16.msra.mxu0 %v386
    %546 = vmatprep.subr.bf16.mxu0 0
    %547 = vmatpush1.bf16.msra.mxu0 %v387
    %548 = vmatprep.subr.bf16.mxu0 0
    %549 = vmatpush1.bf16.msra.mxu0 %v388
    %550 = vmatprep.subr.bf16.mxu0 0
    %551 = vmatpush1.bf16.msra.mxu0 %v389
    %552 = vmatprep.mubr.bf16.mxu0 %v46
    %553 = vmatmul.mubr.bf16.gmra.mrb[0].mxu0 %v45
    %v554 = vpop.f32.mrb[0].mxu0
    %v555 = vadd.f32 %v514, %v554
    %v556 = vpop.f32.mrb[0].mxu0
    %v557 = vpop.f32.mrb[0].mxu0
    %v558 = vadd.f32 %v517, %v557
    %v559 = vpop.f32.mrb[0].mxu0
    %560 = vdwg.mxu0
    %561 = vst [vmem:[%s3] sm:$0xff] %v555
    %562 = vst [vmem:[%s3 + $0x8] sm:$0xff] %v558
    // Predicated region
    $region18: #{regression_model_adapters_forward.1} parent=1 // pred_check
      _
    $region19: #{regression_model_adapters_forward.1} parent=1 // pred_check_branch
      %564 = sbr.rel (0) target = $region21
    $region20: #{regression_model_adapters_forward.1} parent=1 // pred_region
      _
    $region21: #{regression_model_adapters_forward.1} parent=1 // pred_fallthru
      _
    // Predicated region
    $region22: #{regression_model_adapters_forward.1} parent=1 // pred_check
      _
    $region23: #{regression_model_adapters_forward.1} parent=1 // pred_check_branch
      %566 = sbr.rel (0) target = $region25
    $region24: #{regression_model_adapters_forward.1} parent=1 // pred_region
      _
    $region25: #{regression_model_adapters_forward.1} parent=1 // pred_fallthru
      _
    %567 = vsyncpa [#allocation3], 1

</llo_original>
